<compile_context>
chip_gen: v6e
topology: v6e:2x2x1
jax: 0.10.0
libtpu: 0.0.40
codegen_flags: <defaults>
</compile_context>

<pallas_src>
import jax
import jax.numpy as jnp
from jax import lax
from jax.experimental import pallas as pl
from jax.experimental.pallas import tpu as pltpu


# ----------------------------- Pallas kernel --------------------------------
def _squeeze_excite_kernel(x_ref, w_r_ref, b_r_ref, w_e_ref, b_e_ref, o_ref):
    # x_ref / o_ref : (NB, C, HW)  channels on sublanes, spatial on lanes
    # w_r_ref: (RD, C)   b_r_ref: (RD, 1)
    # w_e_ref: (C, RD)   b_e_ref: (C, 1)
    nb = x_ref.shape[0]
    inv_hw = jnp.float32(1.0 / x_ref.shape[2])

    def body(i, carry):
        # ---- load one image, promote to f32 for all math (bf16-safe) ----
        xi = x_ref[i].astype(jnp.float32)                       # (C, HW)

        # ---- global average pool over spatial dims (lane-axis reduce) ----
        x_se = jnp.sum(xi, axis=1, keepdims=True) * inv_hw      # (C, 1)

        # ---- conv_reduce (1x1, bias) + ReLU ----
        h = jnp.dot(w_r_ref[...], x_se,
                    preferred_element_type=jnp.float32) + b_r_ref[...]   # (RD,1)
        h = jnp.maximum(h, 0.0)

        # ---- conv_expand (1x1, bias) + sigmoid gate (exp on EUP) ----
        g = jnp.dot(w_e_ref[...], h,
                    preferred_element_type=jnp.float32) + b_e_ref[...]   # (C,1)
        gate = pl.reciprocal(1.0 + jnp.exp(-g))                  # exact 1/x

        # ---- scale: broadcast (C,1) gate over lanes; dense store ----
        o_ref[i] = (xi * gate).astype(o_ref.dtype)
        return carry

    # Bounded live range per image; unroll only for short trip counts.
    lax.fori_loop(0, nb, body, 0, unroll=(nb <= 8))


# ------------------------------- wrapper -------------------------------------
def squeeze_excite(x_nchw, params, *, block_bytes=2 << 20,
                   vmem_limit_bytes=32 * 1024 * 1024):
    """x_nchw: (N, C, H, W) f32 or bf16 -> same shape/dtype. NCHW-native."""
    N, C, H, W = x_nchw.shape
    HW = H * W
    RD = params["w_reduce"].shape[0]
    act_dtype = x_nchw.dtype

    x3 = x_nchw.reshape(N, C, HW)                 # contiguous reshape
    itemsize = jnp.dtype(act_dtype).itemsize

    # ---- pick images-per-block: ~block_bytes per step, but keep >=2 steps ----
    per_image = C * HW * itemsize
    NB = max(1, min(N, block_bytes // per_image))
    if N > 1 and pl.cdiv(N, NB) < 2:
        NB = pl.cdiv(N, 2)                        # keep both TCs busy on v7x
    grid = (pl.cdiv(N, NB),)

    w_r = params["w_reduce"].astype(jnp.float32)  # (RD, C)
    b_r = params["b_reduce"].astype(jnp.float32)  # (RD, 1)
    w_e = params["w_expand"].astype(jnp.float32)  # (C, RD)
    b_e = params["b_expand"].astype(jnp.float32)  # (C, 1)

    cost = pl.CostEstimate(
        flops=N * (2 * C * HW + 2 * RD * C + 2 * C * RD),
        transcendentals=N * C,
        bytes_accessed=2 * N * C * HW * itemsize
        + (RD * C + RD + C * RD + C) * 4,
    )

    const2 = lambda n: (0, 0)

    y3 = pl.pallas_call(
        _squeeze_excite_kernel,
        out_shape=jax.ShapeDtypeStruct((N, C, HW), act_dtype),
        grid_spec=pltpu.PrefetchScalarGridSpec(
            num_scalar_prefetch=0,
            grid=grid,
            in_specs=[
                pl.BlockSpec((NB, C, HW), lambda n: (n, 0, 0)),
                pl.BlockSpec((RD, C), const2),
                pl.BlockSpec((RD, 1), const2),
                pl.BlockSpec((C, RD), const2),
                pl.BlockSpec((C, 1), const2),
            ],
            out_specs=pl.BlockSpec((NB, C, HW), lambda n: (n, 0, 0)),
        ),
        compiler_params=pltpu.CompilerParams(
            dimension_semantics=("parallel",),
            vmem_limit_bytes=vmem_limit_bytes),
        cost_estimate=cost,
    )(x3, w_r, b_r, w_e, b_e)

    return y3.reshape(N, C, H, W)


# ------------------------- pure-JAX reference -------------------------------
def reference(x, p):
    x_se = x.mean(axis=(2, 3), keepdims=True)                       # (N,C,1,1)
    h = jnp.einsum("nchw,rc->nrhw", x_se, p["w_reduce"]) \
        + p["b_reduce"].reshape(1, -1, 1, 1)
    h = jnp.maximum(h, 0.0)
    g = jnp.einsum("nrhw,cr->nchw", h, p["w_expand"]) \
        + p["b_expand"].reshape(1, -1, 1, 1)
    return x * jax.nn.sigmoid(g)


# ------------------------------- setup --------------------------------------
def init_params(key, in_chs, rd_ratio=0.25):
    rd_channels = round(in_chs * rd_ratio)                 # module default
    k = jax.random.split(key, 4)
    w_reduce = jax.random.normal(k[0], (rd_channels, in_chs), jnp.float32) * 0.1
    b_reduce = jax.random.normal(k[1], (rd_channels, 1), jnp.float32) * 0.1
    w_expand = jax.random.normal(k[2], (in_chs, rd_channels), jnp.float32) * 0.1
    b_expand = jax.random.normal(k[3], (in_chs, 1), jnp.float32) * 0.1
    return dict(w_reduce=w_reduce, b_reduce=b_reduce,
                w_expand=w_expand, b_expand=b_expand), rd_channels


if __name__ == "__main__":
    N, C, H, W = 2, 32, 16, 16          # rd_channels = round(32*0.25) = 8

    key = jax.random.PRNGKey(0)
    k_x, k_p = jax.random.split(key)
    x = jax.random.normal(k_x, (N, C, H, W), jnp.float32)
    params, rd = init_params(k_p, C)

    # ---- f32 activation path: tight correctness check ----
    y = jax.block_until_ready(squeeze_excite(x, params))
    y_ref = reference(x, params)
    assert y.shape == (N, C, H, W)
    assert jnp.allclose(y, y_ref, atol=1e-5, rtol=1e-5), \
        float(jnp.max(jnp.abs(y - y_ref)))

    # ---- bf16 activation I/O path (halves HBM bytes; math stays f32) ----
    x_bf = x.astype(jnp.bfloat16)
    y_bf = jax.block_until_ready(squeeze_excite(x_bf, params))
    y_bf_ref = reference(x_bf.astype(jnp.float32), params)
    assert y_bf.dtype == jnp.bfloat16
    assert jnp.allclose(y_bf.astype(jnp.float32), y_bf_ref,
                        atol=5e-2, rtol=2e-2), \
        float(jnp.max(jnp.abs(y_bf.astype(jnp.float32) - y_bf_ref)))

    print("KERNEL_OK")
</pallas_src>

<mosaic_0001>
module attributes {stable_mosaic.version = 11 : i64} {
  func.func @_squeeze_excite_kernel(%arg0: i32, %arg1: memref<1x32x256xf32, #tpu.memory_space<vmem>>, %arg2: memref<8x32xf32, #tpu.memory_space<vmem>>, %arg3: memref<8x1xf32, #tpu.memory_space<vmem>>, %arg4: memref<32x8xf32, #tpu.memory_space<vmem>>, %arg5: memref<32x1xf32, #tpu.memory_space<vmem>>, %arg6: memref<1x32x256xf32, #tpu.memory_space<vmem>>) attributes {dimension_semantics = [#tpu.dimension_semantics<parallel>], iteration_bounds = array<i64: 2>, scalar_prefetch = 0 : i64, scratch_operands = 0 : i64, tpu.core_type = #tpu.core_type<tc>, window_params = [{transform_indices = @transform_0, window_bounds = array<i64: 1, 32, 256>}, {pipeline_mode = #tpu.pipeline_mode<synchronous>, transform_indices = @transform_1, window_bounds = array<i64: 8, 32>}, {pipeline_mode = #tpu.pipeline_mode<synchronous>, transform_indices = @transform_2, window_bounds = array<i64: 8, 1>}, {pipeline_mode = #tpu.pipeline_mode<synchronous>, transform_indices = @transform_3, window_bounds = array<i64: 32, 8>}, {pipeline_mode = #tpu.pipeline_mode<synchronous>, transform_indices = @transform_4, window_bounds = array<i64: 32, 1>}, {transform_indices = @transform_5, window_bounds = array<i64: 1, 32, 256>}]} {
    %cst = arith.constant 3.906250e-03 : f32
    %c0_i32 = arith.constant 0 : i32
    %0 = arith.index_cast %c0_i32 : i32 to index
    %c0 = arith.constant 0 : index
    %c0_0 = arith.constant 0 : index
    %1 = vector.load %arg1[%0, %c0, %c0_0] : memref<1x32x256xf32, #tpu.memory_space<vmem>>, vector<1x32x256xf32>
    %2 = vector.shape_cast %1 : vector<1x32x256xf32> to vector<32x256xf32>
    %cst_1 = arith.constant dense<0.000000e+00> : vector<32xf32>
    %3 = vector.multi_reduction <add>, %2, %cst_1 [1] : vector<32x256xf32> to vector<32xf32>
    %4 = vector.shape_cast %3 : vector<32xf32> to vector<32x1xf32>
    %5 = vector.broadcast %cst : f32 to vector<32x1xf32>
    %6 = arith.mulf %4, %5 : vector<32x1xf32>
    %c0_2 = arith.constant 0 : index
    %c0_3 = arith.constant 0 : index
    %7 = vector.load %arg2[%c0_2, %c0_3] : memref<8x32xf32, #tpu.memory_space<vmem>>, vector<8x32xf32>
    %cst_4 = arith.constant dense<0.000000e+00> : vector<8x1xf32>
    %8 = tpu.matmul %7, %6, %cst_4 {dimension_numbers = #tpu.dot_dimension_numbers<[1], [0], [0], [1], [0, 0, 1, 1], [], []>} : vector<8x32xf32>, vector<32x1xf32>, vector<8x1xf32> -> vector<8x1xf32>
    %c0_5 = arith.constant 0 : index
    %c0_6 = arith.constant 0 : index
    %9 = vector.load %arg3[%c0_5, %c0_6] : memref<8x1xf32, #tpu.memory_space<vmem>>, vector<8x1xf32>
    %10 = arith.addf %8, %9 : vector<8x1xf32>
    %cst_7 = arith.constant 0.000000e+00 : f32
    %11 = vector.broadcast %cst_7 : f32 to vector<8x1xf32>
    %12 = arith.maximumf %10, %11 : vector<8x1xf32>
    %c0_8 = arith.constant 0 : index
    %c0_9 = arith.constant 0 : index
    %13 = vector.load %arg4[%c0_8, %c0_9] : memref<32x8xf32, #tpu.memory_space<vmem>>, vector<32x8xf32>
    %cst_10 = arith.constant dense<0.000000e+00> : vector<32x1xf32>
    %14 = tpu.matmul %13, %12, %cst_10 {dimension_numbers = #tpu.dot_dimension_numbers<[1], [0], [0], [1], [0, 0, 1, 1], [], []>} : vector<32x8xf32>, vector<8x1xf32>, vector<32x1xf32> -> vector<32x1xf32>
    %c0_11 = arith.constant 0 : index
    %c0_12 = arith.constant 0 : index
    %15 = vector.load %arg5[%c0_11, %c0_12] : memref<32x1xf32, #tpu.memory_space<vmem>>, vector<32x1xf32>
    %16 = arith.addf %14, %15 : vector<32x1xf32>
    %cst_13 = arith.constant 0.000000e+00 : f32
    %17 = vector.broadcast %cst_13 : f32 to vector<32x1xf32>
    %18 = arith.subf %17, %16 : vector<32x1xf32>
    %19 = math.exp %18 : vector<32x1xf32>
    %cst_14 = arith.constant 1.000000e+00 : f32
    %20 = vector.broadcast %cst_14 : f32 to vector<32x1xf32>
    %21 = arith.addf %20, %19 : vector<32x1xf32>
    %22 = tpu.reciprocal %21 : vector<32x1xf32> -> vector<32x1xf32>
    %23 = vector.broadcast %22 : vector<32x1xf32> to vector<32x256xf32>
    %24 = arith.mulf %2, %23 : vector<32x256xf32>
    %25 = arith.index_cast %c0_i32 : i32 to index
    %c0_15 = arith.constant 0 : index
    %c0_16 = arith.constant 0 : index
    %26 = vector.load %arg6[%25, %c0_15, %c0_16] : memref<1x32x256xf32, #tpu.memory_space<vmem>>, vector<1x32x256xf32>
    %27 = vector.shape_cast %26 : vector<1x32x256xf32> to vector<32x256xf32>
    %28 = vector.shape_cast %24 : vector<32x256xf32> to vector<1x32x256xf32>
    tpu.vector_store %arg6[%25, %c0_15, %c0_16], %28 {strides = array<i32>} : memref<1x32x256xf32, #tpu.memory_space<vmem>>, vector<1x32x256xf32>,
    %c1_i32 = arith.constant 1 : i32
    return
  }
  func.func @transform_0(%arg0: i32) -> (i32, i32, i32) {
    %c0_i32 = arith.constant 0 : i32
    %c0_i32_0 = arith.constant 0 : i32
    %c0_i32_1 = arith.constant 0 : i32
    return %arg0, %c0_i32, %c0_i32_0 : i32, i32, i32
  }
  func.func @transform_1(%arg0: i32) -> (i32, i32) {
    %c0_i32 = arith.constant 0 : i32
    %c0_i32_0 = arith.constant 0 : i32
    %c0_i32_1 = arith.constant 0 : i32
    return %c0_i32, %c0_i32_0 : i32, i32
  }
  func.func @transform_2(%arg0: i32) -> (i32, i32) {
    %c0_i32 = arith.constant 0 : i32
    %c0_i32_0 = arith.constant 0 : i32
    %c0_i32_1 = arith.constant 0 : i32
    return %c0_i32, %c0_i32_0 : i32, i32
  }
  func.func @transform_3(%arg0: i32) -> (i32, i32) {
    %c0_i32 = arith.constant 0 : i32
    %c0_i32_0 = arith.constant 0 : i32
    %c0_i32_1 = arith.constant 0 : i32
    return %c0_i32, %c0_i32_0 : i32, i32
  }
  func.func @transform_4(%arg0: i32) -> (i32, i32) {
    %c0_i32 = arith.constant 0 : i32
    %c0_i32_0 = arith.constant 0 : i32
    %c0_i32_1 = arith.constant 0 : i32
    return %c0_i32, %c0_i32_0 : i32, i32
  }
  func.func @transform_5(%arg0: i32) -> (i32, i32, i32) {
    %c0_i32 = arith.constant 0 : i32
    %c0_i32_0 = arith.constant 0 : i32
    %c0_i32_1 = arith.constant 0 : i32
    return %arg0, %c0_i32, %c0_i32_0 : i32, i32, i32
  }
}

</mosaic_0001>

<llo_original>
// kernel: tpu_custom_call.1
$region0: #{tpu_custom_call.1}
  #allocation0 [shape = 'u32[]', space=smem, size = 0x4, offset = 0x4, fixed_abs, tag = 'smem constant byte address 0x4 - core index']
  #allocation1 [shape = 'u32[144,128]{1,0:T(1,128)}', space=vmem, size = 0x12000, scoped, tag = 'internal scratch']
  %s0 = inlined_call_operand.hbm [shape: f32[2,32,256], index: 0, kind: input, shape index: {}]
  %s1 = inlined_call_operand.vmem [shape: f32[8,32], index: 1, kind: input, shape index: {}]
  %s2 = inlined_call_operand.vmem [shape: f32[8,1], index: 2, kind: input, shape index: {}]
  %s3 = inlined_call_operand.vmem [shape: f32[32,8], index: 3, kind: input, shape index: {}]
  %s4 = inlined_call_operand.vmem [shape: f32[32,1], index: 4, kind: input, shape index: {}]
  %s5 = inlined_call_operand.hbm [shape: f32[2,32,256], index: 5, kind: output, shape index: {}]
  %s6 = sld [smem:[#allocation0]]
  $region57: #{tpu_custom_call.1} parent=0
    _
  %s8 = ssub.s32 1, %s6
  %s9 = scalar_select 0, %s8, %s6
  $region1: #{tpu_custom_call.1} parent=0
    #allocation2 [shape = 'u8[65536]{0}', space=vmem, size = 0x10000, scoped, tag = 'input window, operand 0']
    #allocation3 [shape = 's32[2]{0}', space=sflag, size = 0x8, scoped, tag = 'scoped memory for tpu_custom_call.1']
    #allocation4 [shape = 's32[2]{0}', space=sflag, size = 0x8, scoped, tag = 'scoped memory for tpu_custom_call.1']
    #allocation5 [shape = 'u8[65536]{0}', space=vmem, size = 0x10000, scoped, tag = 'output window, operand 0']
    %10 = vsyncpa [#allocation3], 0
    %s11 = scalar_lea.sflag [#allocation3], 1
    %12 = vsyncpa %s11, 0
    %13 = vsyncpa [#allocation4], 0
    %s14 = scalar_lea.sflag [#allocation4], 1
    %15 = vsyncpa %s14, 0
    loop: start=0, step=1, limit=4
    $region2: #{tpu_custom_call.1} parent=1 // loop_pre_header
      _
    $region3: #{tpu_custom_call.1} parent=1 // loop_header
      %s17 = sphi 0, %s21
      %p18 = scmp.ge.s32.totalorder %s17, 4
      %s27 = sphi 0, %s29
      %s30 = sphi 0, %s27
      %s31 = sphi 0, %s30
      %s47 = sphi 0, %s31
      %s51 = sphi 0, %s51
      %s53 = sphi 0, %s51
      %s54 = sphi 0, %s53
      %s68 = sphi 0, %s54
      %s72 = sphi 0, %s72
      %s74 = sphi 0, %s72
      %s75 = sphi 0, %s74
      %s89 = sphi 0, %s75
      %s93 = sphi 0, %s93
      %s95 = sphi 0, %s93
      %s96 = sphi 0, %s95
      %s110 = sphi 0, %s96
      %s114 = sphi 0, %s114
      %s116 = sphi 0, %s114
      %s117 = sphi 0, %s116
      %s131 = sphi 0, %s117
      %s137 = sphi 0, %s139
      %s140 = sphi 0, %s137
      %s141 = sphi 0, %s140
      %s157 = sphi 0, %s141
    $region4: #{tpu_custom_call.1} parent=1 // loop_header_branch
      %20 = sbr.rel (%p18) target = $region8
    $region5: #{tpu_custom_call.1} parent=1 // loop_body
      %s22 = ssub.s32 %s17, 1
      %s23 = ssub.s32 %s17, 2
      %s24 = sadd.s32 %s17, 1
      %s25 = ssub.s32 %s17, %s24
      %p26 = scmp.eq.s32.totalorder %s25, 0
      %s28 = sadd.s32 %s27, 1
      %s29 = scalar_select %p26, %s27, %s28
      %p32 = pneg %p26
      %p33 = scmp.eq.s32.totalorder %s17, 1
      %p34 = por %p32, %p33
      %p35 = scmp.ne.s32.totalorder %s27, %s30
      %p36 = scmp.eq.s32.totalorder %s17, 0
      %p37 = por %p35, %p36
      %p38 = scmp.ne.s32.totalorder %s27, %s30
      %p39 = scmp.eq.s32.totalorder %s22, 1
      %p40 = por %p38, %p39
      %p41 = scmp.ne.s32.totalorder %s30, %s31
      %p42 = scmp.eq.s32.totalorder %s22, 0
      %p43 = por %p41, %p42
      %p44 = scmp.ne.s32.totalorder %s30, %s31
      %p45 = scmp.eq.s32.totalorder %s23, 1
      %p46 = por %p44, %p45
      %p48 = scmp.ne.s32.totalorder %s31, %s47
      %p49 = scmp.eq.s32.totalorder %s23, 0
      %p50 = por %p48, %p49
      %s52 = sadd.s32 %s51, 1
      %p55 = scmp.eq.s32.totalorder %s17, 1
      %p56 = scmp.ne.s32.totalorder %s51, %s53
      %p57 = scmp.eq.s32.totalorder %s17, 0
      %p58 = por %p56, %p57
      %p59 = scmp.ne.s32.totalorder %s51, %s53
      %p60 = scmp.eq.s32.totalorder %s22, 1
      %p61 = por %p59, %p60
      %p62 = scmp.ne.s32.totalorder %s53, %s54
      %p63 = scmp.eq.s32.totalorder %s22, 0
      %p64 = por %p62, %p63
      %p65 = scmp.ne.s32.totalorder %s53, %s54
      %p66 = scmp.eq.s32.totalorder %s23, 1
      %p67 = por %p65, %p66
      %p69 = scmp.ne.s32.totalorder %s54, %s68
      %p70 = scmp.eq.s32.totalorder %s23, 0
      %p71 = por %p69, %p70
      %s73 = sadd.s32 %s72, 1
      %p76 = scmp.eq.s32.totalorder %s17, 1
      %p77 = scmp.ne.s32.totalorder %s72, %s74
      %p78 = scmp.eq.s32.totalorder %s17, 0
      %p79 = por %p77, %p78
      %p80 = scmp.ne.s32.totalorder %s72, %s74
      %p81 = scmp.eq.s32.totalorder %s22, 1
      %p82 = por %p80, %p81
      %p83 = scmp.ne.s32.totalorder %s74, %s75
      %p84 = scmp.eq.s32.totalorder %s22, 0
      %p85 = por %p83, %p84
      %p86 = scmp.ne.s32.totalorder %s74, %s75
      %p87 = scmp.eq.s32.totalorder %s23, 1
      %p88 = por %p86, %p87
      %p90 = scmp.ne.s32.totalorder %s75, %s89
      %p91 = scmp.eq.s32.totalorder %s23, 0
      %p92 = por %p90, %p91
      %s94 = sadd.s32 %s93, 1
      %p97 = scmp.eq.s32.totalorder %s17, 1
      %p98 = scmp.ne.s32.totalorder %s93, %s95
      %p99 = scmp.eq.s32.totalorder %s17, 0
      %p100 = por %p98, %p99
      %p101 = scmp.ne.s32.totalorder %s93, %s95
      %p102 = scmp.eq.s32.totalorder %s22, 1
      %p103 = por %p101, %p102
      %p104 = scmp.ne.s32.totalorder %s95, %s96
      %p105 = scmp.eq.s32.totalorder %s22, 0
      %p106 = por %p104, %p105
      %p107 = scmp.ne.s32.totalorder %s95, %s96
      %p108 = scmp.eq.s32.totalorder %s23, 1
      %p109 = por %p107, %p108
      %p111 = scmp.ne.s32.totalorder %s96, %s110
      %p112 = scmp.eq.s32.totalorder %s23, 0
      %p113 = por %p111, %p112
      %s115 = sadd.s32 %s114, 1
      %p118 = scmp.eq.s32.totalorder %s17, 1
      %p119 = scmp.ne.s32.totalorder %s114, %s116
      %p120 = scmp.eq.s32.totalorder %s17, 0
      %p121 = por %p119, %p120
      %p122 = scmp.ne.s32.totalorder %s114, %s116
      %p123 = scmp.eq.s32.totalorder %s22, 1
      %p124 = por %p122, %p123
      %p125 = scmp.ne.s32.totalorder %s116, %s117
      %p126 = scmp.eq.s32.totalorder %s22, 0
      %p127 = por %p125, %p126
      %p128 = scmp.ne.s32.totalorder %s116, %s117
      %p129 = scmp.eq.s32.totalorder %s23, 1
      %p130 = por %p128, %p129
      %p132 = scmp.ne.s32.totalorder %s117, %s131
      %p133 = scmp.eq.s32.totalorder %s23, 0
      %p134 = por %p132, %p133
      %s135 = ssub.s32 %s17, %s24
      %p136 = scmp.eq.s32.totalorder %s135, 0
      %s138 = sadd.s32 %s137, 1
      %s139 = scalar_select %p136, %s137, %s138
      %p142 = pneg %p136
      %p143 = scmp.eq.s32.totalorder %s17, 1
      %p144 = por %p142, %p143
      %p145 = scmp.ne.s32.totalorder %s137, %s140
      %p146 = scmp.eq.s32.totalorder %s17, 0
      %p147 = por %p145, %p146
      %p148 = scmp.ne.s32.totalorder %s137, %s140
      %p149 = scmp.eq.s32.totalorder %s22, 1
      %p150 = por %p148, %p149
      %p151 = scmp.ne.s32.totalorder %s140, %s141
      %p152 = scmp.eq.s32.totalorder %s22, 0
      %p153 = por %p151, %p152
      %p154 = scmp.ne.s32.totalorder %s140, %s141
      %p155 = scmp.eq.s32.totalorder %s23, 1
      %p156 = por %p154, %p155
      %p158 = scmp.ne.s32.totalorder %s141, %s157
      %p159 = scmp.eq.s32.totalorder %s23, 0
      %p160 = por %p158, %p159
      %p161 = scmp.le.s32.totalorder 1, %s17
      %p162 = scmp.lt.s32.totalorder %s17, 3
      %p163 = pnand %p161, %p162
      %p164 = pneg %p163
      // Predicated region
      $region9: #{tpu_custom_call.1} parent=5 // pred_check
        _
      $region10: #{tpu_custom_call.1} parent=5 // pred_check_branch
        %166 = sbr.rel (%p163) target = $region12
      $region11: #{tpu_custom_call.1} parent=5 // pred_region
        %s167 = ssub.s32 %s17, 1
        // Predicated region
        $region13: #{tpu_custom_call.1} parent=11 // pred_check
          %p168 = pneg %p64
        $region14: #{tpu_custom_call.1} parent=11 // pred_check_branch
          %170 = sbr.rel (%p168) target = $region16
        $region15: #{tpu_custom_call.1} parent=11 // pred_region
          _
        $region16: #{tpu_custom_call.1} parent=11 // pred_fallthru
          _
        // Predicated region
        $region17: #{tpu_custom_call.1} parent=11 // pred_check
          %p171 = pneg %p85
        $region18: #{tpu_custom_call.1} parent=11 // pred_check_branch
          %173 = sbr.rel (%p171) target = $region20
        $region19: #{tpu_custom_call.1} parent=11 // pred_region
          _
        $region20: #{tpu_custom_call.1} parent=11 // pred_fallthru
          _
        // Predicated region
        $region21: #{tpu_custom_call.1} parent=11 // pred_check
          %p174 = pneg %p106
        $region22: #{tpu_custom_call.1} parent=11 // pred_check_branch
          %176 = sbr.rel (%p174) target = $region24
        $region23: #{tpu_custom_call.1} parent=11 // pred_region
          _
        $region24: #{tpu_custom_call.1} parent=11 // pred_fallthru
          _
        // Predicated region
        $region25: #{tpu_custom_call.1} parent=11 // pred_check
          %p177 = pneg %p127
        $region26: #{tpu_custom_call.1} parent=11 // pred_check_branch
          %179 = sbr.rel (%p177) target = $region28
        $region27: #{tpu_custom_call.1} parent=11 // pred_region
          _
        $region28: #{tpu_custom_call.1} parent=11 // pred_fallthru
          _
      $region12: #{tpu_custom_call.1} parent=5 // pred_fallthru
        _
      %p180 = scmp.lt.s32.totalorder %s17, 2
      // Predicated region
      $region29: #{tpu_custom_call.1} parent=5 // pred_check
        %p181 = pneg %p180
      $region30: #{tpu_custom_call.1} parent=5 // pred_check_branch
        %183 = sbr.rel (%p181) target = $region32
      $region31: #{tpu_custom_call.1} parent=5 // pred_region
        // Predicated region
        $region33: #{tpu_custom_call.1} parent=31 // pred_check
          %p184 = pneg %p37
        $region34: #{tpu_custom_call.1} parent=31 // pred_check_branch
          %186 = sbr.rel (%p184) target = $region36
        $region35: #{tpu_custom_call.1} parent=31 // pred_region
          %s187 = sand.u32 %s27, 1
          %s188 = scalar_lea.sflag [#allocation3], %s187
          %s189 = sand.u32 %s27, 1
          %s190 = smul.addr %s189, 64
          %s191 = scalar_lea.vmem [#allocation2], %s190
          %s193 = ssub.s32 1024, 1024
          %194 = vsyncadd %s188, %s193
          %s195 = smul.addr %s17, 8
          %s196 = smul.addr %s195, 128
          %s197 = scalar_lea.hbm %s0, %s196
          %s198 = sshll.u32 %s191, 4
          %s199 = int_to_ptr.vmem [resolvable:$true] %s198
          %204 = dma.hbm_to_vmem [thread:$0]  %s197, 1024, %s199, %s188, 256, 256, 16
        $region36: #{tpu_custom_call.1} parent=31 // pred_fallthru
          _
      $region32: #{tpu_custom_call.1} parent=5 // pred_fallthru
        _
      %p205 = scmp.le.s32.totalorder 1, %s17
      %p206 = scmp.lt.s32.totalorder %s17, 3
      %p207 = pnand %p205, %p206
      %p208 = pneg %p207
      // Predicated region
      $region37: #{tpu_custom_call.1} parent=5 // pred_check
        _
      $region38: #{tpu_custom_call.1} parent=5 // pred_check_branch
        %210 = sbr.rel (%p207) target = $region40
      $region39: #{tpu_custom_call.1} parent=5 // pred_region
        %s211 = ssub.s32 %s17, 1
        %s212 = sand.u32 %s30, 1
        %s213 = scalar_lea.sflag [#allocation3], %s212
        %s214 = sand.u32 %s30, 1
        %s215 = smul.addr %s214, 64
        %s216 = scalar_lea.vmem [#allocation2], %s215
        // Predicated region
        $region41: #{tpu_custom_call.1} parent=39 // pred_check
          %p217 = pneg %p43
        $region42: #{tpu_custom_call.1} parent=39 // pred_check_branch
          %219 = sbr.rel (%p217) target = $region44
        $region43: #{tpu_custom_call.1} parent=39 // pred_region
          %220 = dma.done %s213, 1024
        $region44: #{tpu_custom_call.1} parent=39 // pred_fallthru
          _
        %s221 = sand.u32 %s30, 1
        %s222 = scalar_lea.sflag [#allocation3], %s221
        %s223 = sand.u32 %s30, 1
        %s224 = smul.addr %s223, 64
        %s225 = scalar_lea.vmem [#allocation2], %s224
        %p226 = pneg %p43
        %p227 = pneg %p40
        %p228 = pneg %p64
        %p229 = pneg %p61
        %p230 = pneg %p85
        %p231 = pneg %p82
        %p232 = pneg %p106
        %p233 = pneg %p103
        %p234 = pneg %p127
        %p235 = pneg %p124
        %p236 = pneg %p153
        %p237 = pneg %p150
        %s238 = sand.u32 %s140, 1
        %s239 = scalar_lea.sflag [#allocation4], %s238
        %s240 = sand.u32 %s140, 1
        %s241 = smul.addr %s240, 64
        %s242 = scalar_lea.vmem [#allocation5], %s241
        %v243 = vld [vmem:[%s216] sm:$0xff]
        %v244 = vld [vmem:[%s216 + $0x8] sm:$0xff]
        %v245 = vld [vmem:[%s216 + $0x10] sm:$0xff]
        %v246 = vld [vmem:[%s216 + $0x18] sm:$0xff]
        %v247 = vld [vmem:[%s216 + $0x20] sm:$0xff]
        %v248 = vld [vmem:[%s216 + $0x28] sm:$0xff]
        %v249 = vld [vmem:[%s216 + $0x30] sm:$0xff]
        %v250 = vld [vmem:[%s216 + $0x38] sm:$0xff]
        %v251 = vadd.f32 %v243, %v244
        %252 = vadd.xlane.f32.xlu0 %v251
        %v253 = vpop.xlane.xlu0 %252
        %v254 = vadd.f32 %v245, %v246
        %255 = vadd.xlane.f32.xlu0 %v254
        %v256 = vpop.xlane.xlu0 %255
        %v257 = vadd.f32 %v247, %v248
        %258 = vadd.xlane.f32.xlu0 %v257
        %v259 = vpop.xlane.xlu0 %258
        %v260 = vadd.f32 %v249, %v250
        %261 = vadd.xlane.f32.xlu0 %v260
        %v262 = vpop.xlane.xlu0 %261
        %v263 = vmul.f32 %v253, 0.00390625
        %v264 = vmul.f32 %v256, 0.00390625
        %v265 = vmul.f32 %v259, 0.00390625
        %v266 = vmul.f32 %v262, 0.00390625
        %v267 = vld [vmem:[%s1] sm:$0xff]
        %v268 = vld [vmem:[%s2] sm:$0xff]
        %vm269 = vcmask 261120
        %v271 = vsel %vm269, %v267, 0
        %273 = vmatprep.subr.mxu0 0.0
        %274 = vmatpush1.msra.mxu0 0.0
        %275 = vmatprep.subr.mxu0 0.0
        %276 = vmatpush1.msra.mxu0 0.0
        %277 = vmatprep.subr.mxu0 0.0
        %278 = vmatpush1.msra.mxu0 0.0
        %279 = vmatprep.subr.mxu0 0.0
        %280 = vmatpush1.msra.mxu0 0.0
        %281 = vmatprep.subr.mxu0 0.0
        %282 = vmatpush1.msra.mxu0 0.0
        %283 = vmatprep.subr.mxu0 0.0
        %284 = vmatpush1.msra.mxu0 0.0
        %285 = vmatprep.subr.mxu0 0.0
        %286 = vmatpush1.msra.mxu0 0.0
        %287 = vmatprep.subr.mxu0 0.0
        %288 = vmatpush1.msra.mxu0 0.0
        %289 = vmatprep.subr.mxu0 0.0
        %290 = vmatpush1.msra.mxu0 0.0
        %291 = vmatprep.subr.mxu0 0.0
        %292 = vmatpush1.msra.mxu0 0.0
        %293 = vmatprep.subr.mxu0 0.0
        %294 = vmatpush1.msra.mxu0 0.0
        %295 = vmatprep.subr.mxu0 0.0
        %296 = vmatpush1.msra.mxu0 0.0
        %297 = vmatprep.subr.mxu0 0.0
        %298 = vmatpush1.msra.mxu0 %v266
        %299 = vmatprep.subr.mxu0 0.0
        %300 = vmatpush1.msra.mxu0 %v265
        %301 = vmatprep.subr.mxu0 0.0
        %302 = vmatpush1.msra.mxu0 %v264
        %303 = vmatprep.subr.mxu0 0.0
        %304 = vmatpush1.msra.mxu0 %v263
        %305 = vmatprep.subr.mxu0 0.0
        %306 = vmatpush2.msra.mxu0 0.0
        %307 = vmatprep.subr.mxu0 0.0
        %308 = vmatpush2.msra.mxu0 0.0
        %309 = vmatprep.subr.mxu0 0.0
        %310 = vmatpush2.msra.mxu0 0.0
        %311 = vmatprep.subr.mxu0 0.0
        %312 = vmatpush2.msra.mxu0 0.0
        %313 = vmatprep.subr.mxu0 0.0
        %314 = vmatpush2.msra.mxu0 0.0
        %315 = vmatprep.subr.mxu0 0.0
        %316 = vmatpush2.msra.mxu0 0.0
        %317 = vmatprep.subr.mxu0 0.0
        %318 = vmatpush2.msra.mxu0 0.0
        %319 = vmatprep.subr.mxu0 0.0
        %320 = vmatpush2.msra.mxu0 0.0
        %321 = vmatprep.subr.mxu0 0.0
        %322 = vmatpush2.msra.mxu0 0.0
        %323 = vmatprep.subr.mxu0 0.0
        %324 = vmatpush2.msra.mxu0 0.0
        %325 = vmatprep.subr.mxu0 0.0
        %326 = vmatpush2.msra.mxu0 0.0
        %327 = vmatprep.subr.mxu0 0.0
        %328 = vmatpush2.msra.mxu0 0.0
        %329 = vmatprep.subr.mxu0 0.0
        %330 = vmatpush2.msra.mxu0 0.0
        %331 = vmatprep.subr.mxu0 0.0
        %332 = vmatpush2.msra.mxu0 0.0
        %333 = vmatprep.subr.mxu0 0.0
        %334 = vmatpush2.msra.mxu0 0.0
        %335 = vmatprep.subr.mxu0 0.0
        %336 = vmatpush2.msra.mxu0 0.0
        %337 = vmatprep.mubr.f32.mxu0 0.0
        %338 = vmatmul.mubr.f32.gmra.mxu0 %v271
        %v339 = vpop.f32.mrf.mxu0
        %v340 = vadd.f32 %v268, %v339
        %v341 = vpop.f32.mrf.mxu0
        %342 = vdwg.mxu0
        %v343 = vmax.f32 %v340, 0.0
        %v344 = vld [vmem:[%s3] sm:$0xff]
        %v345 = vld [vmem:[%s3 + $0x8] sm:$0xff]
        %v346 = vld [vmem:[%s3 + $0x10] sm:$0xff]
        %v347 = vld [vmem:[%s3 + $0x18] sm:$0xff]
        %v348 = vld [vmem:[%s4] sm:$0xff]
        %v349 = vld [vmem:[%s4 + $0x8] sm:$0xff]
        %v350 = vld [vmem:[%s4 + $0x10] sm:$0xff]
        %v351 = vld [vmem:[%s4 + $0x18] sm:$0xff]
        %vm352 = vcmask 64512
        %v354 = vsel %vm352, %v344, 0
        %v357 = vsel %vm352, %v345, 0
        %v360 = vsel %vm352, %v346, 0
        %v363 = vsel %vm352, %v347, 0
        %365 = vmatprep.subr.mxu0 0.0
        %366 = vmatpush1.msra.mxu0 0.0
        %367 = vmatprep.subr.mxu0 0.0
        %368 = vmatpush1.msra.mxu0 0.0
        %369 = vmatprep.subr.mxu0 0.0
        %370 = vmatpush1.msra.mxu0 0.0
        %371 = vmatprep.subr.mxu0 0.0
        %372 = vmatpush1.msra.mxu0 0.0
        %373 = vmatprep.subr.mxu0 0.0
        %374 = vmatpush1.msra.mxu0 0.0
        %375 = vmatprep.subr.mxu0 0.0
        %376 = vmatpush1.msra.mxu0 0.0
        %377 = vmatprep.subr.mxu0 0.0
        %378 = vmatpush1.msra.mxu0 0.0
        %379 = vmatprep.subr.mxu0 0.0
        %380 = vmatpush1.msra.mxu0 0.0
        %381 = vmatprep.subr.mxu0 0.0
        %382 = vmatpush1.msra.mxu0 0.0
        %383 = vmatprep.subr.mxu0 0.0
        %384 = vmatpush1.msra.mxu0 0.0
        %385 = vmatprep.subr.mxu0 0.0
        %386 = vmatpush1.msra.mxu0 0.0
        %387 = vmatprep.subr.mxu0 0.0
        %388 = vmatpush1.msra.mxu0 0.0
        %389 = vmatprep.subr.mxu0 0.0
        %390 = vmatpush1.msra.mxu0 0.0
        %391 = vmatprep.subr.mxu0 0.0
        %392 = vmatpush1.msra.mxu0 0.0
        %393 = vmatprep.subr.mxu0 0.0
        %394 = vmatpush1.msra.mxu0 0.0
        %395 = vmatprep.subr.mxu0 0.0
        %396 = vmatpush1.msra.mxu0 %v343
        %397 = vmatprep.subr.mxu0 0.0
        %398 = vmatpush2.msra.mxu0 0.0
        %399 = vmatprep.subr.mxu0 0.0
        %400 = vmatpush2.msra.mxu0 0.0
        %401 = vmatprep.subr.mxu0 0.0
        %402 = vmatpush2.msra.mxu0 0.0
        %403 = vmatprep.subr.mxu0 0.0
        %404 = vmatpush2.msra.mxu0 0.0
        %405 = vmatprep.subr.mxu0 0.0
        %406 = vmatpush2.msra.mxu0 0.0
        %407 = vmatprep.subr.mxu0 0.0
        %408 = vmatpush2.msra.mxu0 0.0
        %409 = vmatprep.subr.mxu0 0.0
        %410 = vmatpush2.msra.mxu0 0.0
        %411 = vmatprep.subr.mxu0 0.0
        %412 = vmatpush2.msra.mxu0 0.0
        %413 = vmatprep.subr.mxu0 0.0
        %414 = vmatpush2.msra.mxu0 0.0
        %415 = vmatprep.subr.mxu0 0.0
        %416 = vmatpush2.msra.mxu0 0.0
        %417 = vmatprep.subr.mxu0 0.0
        %418 = vmatpush2.msra.mxu0 0.0
        %419 = vmatprep.subr.mxu0 0.0
        %420 = vmatpush2.msra.mxu0 0.0
        %421 = vmatprep.subr.mxu0 0.0
        %422 = vmatpush2.msra.mxu0 0.0
        %423 = vmatprep.subr.mxu0 0.0
        %424 = vmatpush2.msra.mxu0 0.0
        %425 = vmatprep.subr.mxu0 0.0
        %426 = vmatpush2.msra.mxu0 0.0
        %427 = vmatprep.subr.mxu0 0.0
        %428 = vmatpush2.msra.mxu0 0.0
        %429 = vmatprep.mubr.f32.mxu0 0.0
        %430 = vmatmul.mubr.f32.gmra.mxu0 %v354
        %v431 = vpop.f32.mrf.mxu0
        %v432 = vadd.f32 %v348, %v431
        %v433 = vpop.f32.mrf.mxu0
        %434 = vmatprep.mubr.f32.mxu0 0.0
        %435 = vmatmul.mubr.f32.gmra.mxu0 %v357
        %v436 = vpop.f32.mrf.mxu0
        %v437 = vadd.f32 %v349, %v436
        %v438 = vpop.f32.mrf.mxu0
        %439 = vmatprep.mubr.f32.mxu0 0.0
        %440 = vmatmul.mubr.f32.gmra.mxu0 %v360
        %v441 = vpop.f32.mrf.mxu0
        %v442 = vadd.f32 %v350, %v441
        %v443 = vpop.f32.mrf.mxu0
        %444 = vmatprep.mubr.f32.mxu0 0.0
        %445 = vmatmul.mubr.f32.gmra.mxu0 %v363
        %v446 = vpop.f32.mrf.mxu0
        %v447 = vadd.f32 %v351, %v446
        %v448 = vpop.f32.mrf.mxu0
        %449 = vdwg.mxu0
        %v450 = vsub.f32 0.0, %v432
        %v451 = vsub.f32 0.0, %v437
        %v452 = vsub.f32 0.0, %v442
        %v453 = vsub.f32 0.0, %v447
        %v454 = vmul.f32 %v450, 1.442695
        %v455 = vpow.pop %v454
        %v456 = vmul.f32 %v451, 1.442695
        %v457 = vpow.pop %v456
        %v458 = vmul.f32 %v452, 1.442695
        %v459 = vpow.pop %v458
        %v460 = vmul.f32 %v453, 1.442695
        %v461 = vpow.pop %v460
        %v462 = vadd.f32 %v455, 1.0
        %v463 = vadd.f32 %v457, 1.0
        %v464 = vadd.f32 %v459, 1.0
        %v465 = vadd.f32 %v461, 1.0
        %v466 = vrcp.pop %v462
        %v467 = vrcp.pop %v463
        %v468 = vrcp.pop %v464
        %v469 = vrcp.pop %v465
        %471 = vset.pattern.permute.xlu0 0
        %472 = vperm.xlu0 %471, %v466
        %v473 = vpop.permute.xlu0 %472
        %476 = vset.pattern.permute.xlu0 0
        %477 = vperm.xlu0 %476, %v467
        %v478 = vpop.permute.xlu0 %477
        %481 = vset.pattern.permute.xlu0 0
        %482 = vperm.xlu0 %481, %v468
        %v483 = vpop.permute.xlu0 %482
        %486 = vset.pattern.permute.xlu0 0
        %487 = vperm.xlu0 %486, %v469
        %v488 = vpop.permute.xlu0 %487
        %v490 = vmul.f32 %v243, %v473
        %v491 = vmul.f32 %v244, %v473
        %v492 = vmul.f32 %v245, %v478
        %v493 = vmul.f32 %v246, %v478
        %v494 = vmul.f32 %v247, %v483
        %v495 = vmul.f32 %v248, %v483
        %v496 = vmul.f32 %v249, %v488
        %v497 = vmul.f32 %v250, %v488
        %498 = vst [vmem:[%s242] sm:$0xff] %v490
        %499 = vst [vmem:[%s242 + $0x8] sm:$0xff] %v491
        %500 = vst [vmem:[%s242 + $0x10] sm:$0xff] %v492
        %501 = vst [vmem:[%s242 + $0x18] sm:$0xff] %v493
        %502 = vst [vmem:[%s242 + $0x20] sm:$0xff] %v494
        %503 = vst [vmem:[%s242 + $0x28] sm:$0xff] %v495
        %504 = vst [vmem:[%s242 + $0x30] sm:$0xff] %v496
        %505 = vst [vmem:[%s242 + $0x38] sm:$0xff] %v497
        %s506 = sand.u32 %s140, 1
        %s507 = scalar_lea.sflag [#allocation4], %s506
        %s508 = sand.u32 %s140, 1
        %s509 = smul.addr %s508, 64
        %s510 = scalar_lea.vmem [#allocation5], %s509
        // Predicated region
        $region45: #{tpu_custom_call.1} parent=39 // pred_check
          %p511 = pneg %p150
        $region46: #{tpu_custom_call.1} parent=39 // pred_check_branch
          %513 = sbr.rel (%p511) target = $region48
        $region47: #{tpu_custom_call.1} parent=39 // pred_region
          %s515 = ssub.s32 1024, 1024
          %516 = vsyncadd %s507, %s515
          %s517 = smul.addr %s22, 8
          %s518 = smul.addr %s517, 128
          %s519 = scalar_lea.hbm %s5, %s518
          %s520 = sshll.u32 %s510, 4
          %s521 = int_to_ptr.vmem [resolvable:$true] %s520
          %526 = dma.vmem_to_hbm [thread:$0]  %s521, 1024, %s519, %s507, 256, 256, 16
        $region48: #{tpu_custom_call.1} parent=39 // pred_fallthru
          _
      $region40: #{tpu_custom_call.1} parent=5 // pred_fallthru
        _
      %p527 = scmp.le.s32.totalorder 2, %s17
      // Predicated region
      $region49: #{tpu_custom_call.1} parent=5 // pred_check
        %p528 = pneg %p527
      $region50: #{tpu_custom_call.1} parent=5 // pred_check_branch
        %530 = sbr.rel (%p528) target = $region52
      $region51: #{tpu_custom_call.1} parent=5 // pred_region
        %s531 = ssub.s32 %s17, 2
        // Predicated region
        $region53: #{tpu_custom_call.1} parent=51 // pred_check
          %p532 = pneg %p156
        $region54: #{tpu_custom_call.1} parent=51 // pred_check_branch
          %534 = sbr.rel (%p532) target = $region56
        $region55: #{tpu_custom_call.1} parent=51 // pred_region
          %s535 = sand.u32 %s141, 1
          %s536 = scalar_lea.sflag [#allocation4], %s535
          %s537 = sand.u32 %s141, 1
          %s538 = smul.addr %s537, 64
          %s539 = scalar_lea.vmem [#allocation5], %s538
          %540 = dma.done %s536, 1024
        $region56: #{tpu_custom_call.1} parent=51 // pred_fallthru
          _
      $region52: #{tpu_custom_call.1} parent=5 // pred_fallthru
        _
    $region6: #{tpu_custom_call.1} parent=1 // loop_footer
      %s21 = sadd.s32 1, %s17
    $region7: #{tpu_custom_call.1} parent=1 // loop_footer_branch
      %16 = sbr.rel target = $region3
    $region8: #{tpu_custom_call.1} parent=1 // loop_exit
      _
    %541 = vsyncpa [#allocation3], 1
    %s542 = scalar_lea.sflag [#allocation3], 1
    %543 = vsyncpa %s542, 1
    %544 = vsyncpa [#allocation4], 1
    %s545 = scalar_lea.sflag [#allocation4], 1
    %546 = vsyncpa %s545, 1

</llo_original>
